<compile_context>
chip_gen: v5e
topology: v5e:2x2
jax: 0.10.0
libtpu: 0.0.40
codegen_flags: <defaults>
</compile_context>

<pallas_src>
import functools

import jax
import jax.numpy as jnp
from jax.experimental import pallas as pl
from jax.experimental.pallas import tpu as pltpu

N_EMBD = 32
N_HEAD = 4
HEAD_SIZE = N_EMBD // N_HEAD
LN_EPS = 1e-5


def _layernorm(h, gamma, beta):
    mu = jnp.mean(h, axis=-1, keepdims=True)
    var = jnp.mean(jnp.square(h - mu), axis=-1, keepdims=True)
    return (h - mu) * jax.lax.rsqrt(var + LN_EPS) * gamma + beta


def block_kernel(x_ref,
                 ln1g_ref, ln1b_ref,
                 wqkv_ref,
                 wo_ref, bo_ref,
                 ln2g_ref, ln2b_ref,
                 w1_ref, b1_ref, w2_ref, b2_ref,
                 o_ref, *, n_head, seq_len):
    x = x_ref[...]                                   # (M, C) f32, M = bt*T
    M, C = x.shape
    T = seq_len
    bt = M // T
    hs = C // n_head

    # ---- LayerNorm 1 + fused QKV projection (single MXU op) ----
    x1 = _layernorm(x, ln1g_ref[...], ln1b_ref[...])
    qkv = jnp.dot(x1.astype(jnp.bfloat16), wqkv_ref[...],
                  preferred_element_type=jnp.float32)        # (M, 3C) f32
    qkv3 = qkv.reshape(bt, T, 3 * C).astype(jnp.bfloat16)    # safe leading split

    # causal additive bias, built once (diagonal always kept -> no NaNs)
    row = jax.lax.broadcasted_iota(jnp.int32, (T, T), 0)
    col = jax.lax.broadcasted_iota(jnp.int32, (T, T), 1)
    bias = jnp.where(row >= col, 0.0, -1e30).astype(jnp.float32)
    bias3 = jnp.broadcast_to(bias[None], (bt, T, T))

    # ---- multi-head causal attention, Bt-batched per head ----
    # output projection accumulated per head: att = sum_h out_h @ Wo[h]
    att = jnp.zeros((M, C), jnp.float32)
    for h in range(n_head):
        qh = qkv3[:, :, h * hs:(h + 1) * hs]                 # (bt, T, hs)
        kh = qkv3[:, :, C + h * hs:C + (h + 1) * hs]
        vh = qkv3[:, :, 2 * C + h * hs:2 * C + (h + 1) * hs]
        # 1/sqrt(hs) is already folded into the q columns of wqkv
        s = jnp.einsum('btd,bsd->bts', qh, kh,
                       preferred_element_type=jnp.float32)   # (bt, T, T)
        s = s + bias3
        s = s - jnp.max(s, axis=-1, keepdims=True)
        p = jnp.exp(s)
        p = p * pl.reciprocal(jnp.sum(p, axis=-1, keepdims=True), approx=True)
        oh = jnp.einsum('bts,bsd->btd', p.astype(jnp.bfloat16), vh,
                        preferred_element_type=jnp.float32)  # (bt, T, hs)
        oh2 = oh.reshape(M, hs).astype(jnp.bfloat16)
        att = att + jnp.dot(oh2, wo_ref[h],
                            preferred_element_type=jnp.float32)

    att = att + bo_ref[...]
    x2 = x + att                                             # residual 1

    # ---- LayerNorm 2 + feed-forward ----
    x2n = _layernorm(x2, ln2g_ref[...], ln2b_ref[...])
    h1 = jnp.dot(x2n.astype(jnp.bfloat16), w1_ref[...],
                 preferred_element_type=jnp.float32) + b1_ref[...]
    h1 = jnp.maximum(h1, 0.0)                                # ReLU (f32)
    ff = jnp.dot(h1.astype(jnp.bfloat16), w2_ref[...],
                 preferred_element_type=jnp.float32) + b2_ref[...]

    o_ref[...] = (x2 + ff).astype(o_ref.dtype)               # residual 2


def blocks_forward(x, params, *, n_head=N_HEAD, block_batch=8):
    B, T, C = x.shape
    hs = C // n_head
    scale = float(hs) ** -0.5

    # --- one-time parameter prep: fuse QKV, fold scale, pre-cast to bf16 ---
    wqkv = jnp.concatenate(
        [params["wq"] * scale, params["wk"], params["wv"]], axis=1
    ).astype(jnp.bfloat16)                                   # (C, 3C)
    wo_heads = params["wo"].reshape(n_head, hs, C).astype(jnp.bfloat16)
    w1 = params["w1"].astype(jnp.bfloat16)                   # (C, 4C)
    w2 = params["w2"].astype(jnp.bfloat16)                   # (4C, C)

    # --- batch blocking: bt sequences per grid step ---
    bt = min(block_batch, B)
    if (bt * T) % 8 != 0:          # keep sublane-aligned blocks
        bt = B
    n_blocks = -(-B // bt)
    Bp = n_blocks * bt

    x2d = x.reshape(B * T, C)
    if Bp != B:
        x2d = jnp.concatenate(
            [x2d, jnp.zeros(((Bp - B) * T, C), x.dtype)], axis=0)

    rows = bt * T
    const2d = lambda shape: pl.BlockSpec(shape, lambda i: (0, 0))
    kernel = functools.partial(block_kernel, n_head=n_head, seq_len=T)

    out2d = pl.pallas_call(
        kernel,
        out_shape=jax.ShapeDtypeStruct((Bp * T, C), x.dtype),
        grid_spec=pltpu.PrefetchScalarGridSpec(
            num_scalar_prefetch=0,
            grid=(n_blocks,),
            in_specs=[
                pl.BlockSpec((rows, C), lambda i: (i, 0)),          # x
                const2d((1, C)), const2d((1, C)),                   # ln1 g/b
                const2d((C, 3 * C)),                                # fused Wqkv
                pl.BlockSpec((n_head, hs, C), lambda i: (0, 0, 0)), # Wo (heads)
                const2d((1, C)),                                    # bo
                const2d((1, C)), const2d((1, C)),                   # ln2 g/b
                const2d((C, 4 * C)), const2d((1, 4 * C)),           # W1, b1
                const2d((4 * C, C)), const2d((1, C)),               # W2, b2
            ],
            out_specs=pl.BlockSpec((rows, C), lambda i: (i, 0)),
        ),
        compiler_params=pltpu.CompilerParams(
            dimension_semantics=("parallel",)),
    )(x2d,
      params["ln1_g"], params["ln1_b"],
      wqkv,
      wo_heads, params["bo"],
      params["ln2_g"], params["ln2_b"],
      w1, params["b1"], w2, params["b2"])

    return out2d[:B * T].reshape(B, T, C)


def init_params(key, n_embd=N_EMBD):
    C = n_embd
    ks = jax.random.split(key, 8)
    scale = 0.02
    return {
        # LayerNorm params (PyTorch default init: weight=1, bias=0)
        "ln1_g": jnp.ones((1, C), jnp.float32),
        "ln1_b": jnp.zeros((1, C), jnp.float32),
        "ln2_g": jnp.ones((1, C), jnp.float32),
        "ln2_b": jnp.zeros((1, C), jnp.float32),
        # attention projections, stored (in, out); no bias (bias=False in Head)
        "wq": scale * jax.random.normal(ks[0], (C, C), jnp.float32),
        "wk": scale * jax.random.normal(ks[1], (C, C), jnp.float32),
        "wv": scale * jax.random.normal(ks[2], (C, C), jnp.float32),
        # output projection (with bias)
        "wo": scale * jax.random.normal(ks[3], (C, C), jnp.float32),
        "bo": scale * jax.random.normal(ks[4], (1, C), jnp.float32),
        # feed-forward
        "w1": scale * jax.random.normal(ks[5], (C, 4 * C), jnp.float32),
        "b1": jnp.zeros((1, 4 * C), jnp.float32),
        "w2": scale * jax.random.normal(ks[6], (4 * C, C), jnp.float32),
        "b2": scale * jax.random.normal(ks[7], (1, C), jnp.float32),
    }


if __name__ == "__main__":
    key = jax.random.PRNGKey(0)
    kx, kp = jax.random.split(key)

    B, T, C = 2, 8, N_EMBD
    x = jax.random.normal(kx, (B, T, C), jnp.float32)
    params = init_params(kp)

    out = blocks_forward(x, params)
    out = jax.block_until_ready(out)
    assert out.shape == (B, T, C)
    print("KERNEL_OK")
</pallas_src>

<mosaic_0001>
module attributes {stable_mosaic.version = 11 : i64} {
  func.func @block_kernel(%arg0: i32, %arg1: memref<16x32xf32, #tpu.memory_space<vmem>>, %arg2: memref<1x32xf32, #tpu.memory_space<vmem>>, %arg3: memref<1x32xf32, #tpu.memory_space<vmem>>, %arg4: memref<32x96xbf16, #tpu.memory_space<vmem>>, %arg5: memref<4x8x32xbf16, #tpu.memory_space<vmem>>, %arg6: memref<1x32xf32, #tpu.memory_space<vmem>>, %arg7: memref<1x32xf32, #tpu.memory_space<vmem>>, %arg8: memref<1x32xf32, #tpu.memory_space<vmem>>, %arg9: memref<32x128xbf16, #tpu.memory_space<vmem>>, %arg10: memref<1x128xf32, #tpu.memory_space<vmem>>, %arg11: memref<128x32xbf16, #tpu.memory_space<vmem>>, %arg12: memref<1x32xf32, #tpu.memory_space<vmem>>, %arg13: memref<16x32xf32, #tpu.memory_space<vmem>>) attributes {dimension_semantics = [#tpu.dimension_semantics<parallel>], iteration_bounds = array<i64: 1>, scalar_prefetch = 0 : i64, scratch_operands = 0 : i64, tpu.core_type = #tpu.core_type<tc>, window_params = [{transform_indices = @transform_0, window_bounds = array<i64: 16, 32>}, {pipeline_mode = #tpu.pipeline_mode<synchronous>, transform_indices = @transform_1, window_bounds = array<i64: 1, 32>}, {pipeline_mode = #tpu.pipeline_mode<synchronous>, transform_indices = @transform_2, window_bounds = array<i64: 1, 32>}, {pipeline_mode = #tpu.pipeline_mode<synchronous>, transform_indices = @transform_3, window_bounds = array<i64: 32, 96>}, {pipeline_mode = #tpu.pipeline_mode<synchronous>, transform_indices = @transform_4, window_bounds = array<i64: 4, 8, 32>}, {pipeline_mode = #tpu.pipeline_mode<synchronous>, transform_indices = @transform_5, window_bounds = array<i64: 1, 32>}, {pipeline_mode = #tpu.pipeline_mode<synchronous>, transform_indices = @transform_6, window_bounds = array<i64: 1, 32>}, {pipeline_mode = #tpu.pipeline_mode<synchronous>, transform_indices = @transform_7, window_bounds = array<i64: 1, 32>}, {pipeline_mode = #tpu.pipeline_mode<synchronous>, transform_indices = @transform_8, window_bounds = array<i64: 32, 128>}, {pipeline_mode = #tpu.pipeline_mode<synchronous>, transform_indices = @transform_9, window_bounds = array<i64: 1, 128>}, {pipeline_mode = #tpu.pipeline_mode<synchronous>, transform_indices = @transform_10, window_bounds = array<i64: 128, 32>}, {pipeline_mode = #tpu.pipeline_mode<synchronous>, transform_indices = @transform_11, window_bounds = array<i64: 1, 32>}, {transform_indices = @transform_12, window_bounds = array<i64: 16, 32>}]} {
    %c0 = arith.constant 0 : index
    %c0_0 = arith.constant 0 : index
    %0 = vector.load %arg1[%c0, %c0_0] : memref<16x32xf32, #tpu.memory_space<vmem>>, vector<16x32xf32>
    %c0_1 = arith.constant 0 : index
    %c0_2 = arith.constant 0 : index
    %1 = vector.load %arg2[%c0_1, %c0_2] : memref<1x32xf32, #tpu.memory_space<vmem>>, vector<1x32xf32>
    %c0_3 = arith.constant 0 : index
    %c0_4 = arith.constant 0 : index
    %2 = vector.load %arg3[%c0_3, %c0_4] : memref<1x32xf32, #tpu.memory_space<vmem>>, vector<1x32xf32>
    %cst = arith.constant dense<0.000000e+00> : vector<16xf32>
    %3 = vector.multi_reduction <add>, %0, %cst [1] : vector<16x32xf32> to vector<16xf32>
    %4 = vector.shape_cast %3 : vector<16xf32> to vector<16x1xf32>
    %cst_5 = arith.constant 3.200000e+01 : f32
    %5 = vector.broadcast %cst_5 : f32 to vector<16x1xf32>
    %6 = arith.divf %4, %5 : vector<16x1xf32>
    %7 = vector.broadcast %6 : vector<16x1xf32> to vector<16x32xf32>
    %8 = arith.subf %0, %7 : vector<16x32xf32>
    %9 = arith.mulf %8, %8 : vector<16x32xf32>
    %cst_6 = arith.constant dense<0.000000e+00> : vector<16xf32>
    %10 = vector.multi_reduction <add>, %9, %cst_6 [1] : vector<16x32xf32> to vector<16xf32>
    %11 = vector.shape_cast %10 : vector<16xf32> to vector<16x1xf32>
    %cst_7 = arith.constant 3.200000e+01 : f32
    %12 = vector.broadcast %cst_7 : f32 to vector<16x1xf32>
    %13 = arith.divf %11, %12 : vector<16x1xf32>
    %14 = vector.broadcast %6 : vector<16x1xf32> to vector<16x32xf32>
    %15 = arith.subf %0, %14 : vector<16x32xf32>
    %cst_8 = arith.constant 9.99999974E-6 : f32
    %16 = vector.broadcast %cst_8 : f32 to vector<16x1xf32>
    %17 = arith.addf %13, %16 : vector<16x1xf32>
    %18 = math.rsqrt %17 : vector<16x1xf32>
    %19 = vector.broadcast %18 : vector<16x1xf32> to vector<16x32xf32>
    %20 = arith.mulf %15, %19 : vector<16x32xf32>
    %21 = vector.broadcast %1 : vector<1x32xf32> to vector<16x32xf32>
    %22 = arith.mulf %20, %21 : vector<16x32xf32>
    %23 = vector.broadcast %2 : vector<1x32xf32> to vector<16x32xf32>
    %24 = arith.addf %22, %23 : vector<16x32xf32>
    %25 = arith.truncf %24 : vector<16x32xf32> to vector<16x32xbf16>
    %c0_9 = arith.constant 0 : index
    %c0_10 = arith.constant 0 : index
    %26 = vector.load %arg4[%c0_9, %c0_10] : memref<32x96xbf16, #tpu.memory_space<vmem>>, vector<32x96xbf16>
    %cst_11 = arith.constant dense<0.000000e+00> : vector<16x96xf32>
    %27 = tpu.matmul %25, %26, %cst_11 {dimension_numbers = #tpu.dot_dimension_numbers<[1], [0], [0], [1], [0, 0, 1, 1], [], []>} : vector<16x32xbf16>, vector<32x96xbf16>, vector<16x96xf32> -> vector<16x96xf32>
    %28 = vector.shape_cast %27 : vector<16x96xf32> to vector<2x8x96xf32>
    %29 = arith.truncf %28 : vector<2x8x96xf32> to vector<2x8x96xbf16>
    %30 = tpu.iota {dimensions = array<i32: 0>} : vector<8x8xi32>
    %31 = tpu.iota {dimensions = array<i32: 1>} : vector<8x8xi32>
    %32 = arith.cmpi sge, %30, %31 : vector<8x8xi32>
    %cst_12 = arith.constant 0.000000e+00 : f32
    %cst_13 = arith.constant -1.000000e+30 : f32
    %33 = vector.broadcast %cst_12 : f32 to vector<8x8xf32>
    %34 = vector.broadcast %cst_13 : f32 to vector<8x8xf32>
    %35 = arith.select %32, %33, %34 : vector<8x8xi1>, vector<8x8xf32>
    %36 = vector.shape_cast %35 : vector<8x8xf32> to vector<1x8x8xf32>
    %37 = vector.shape_cast %36 : vector<1x8x8xf32> to vector<1x8x8xf32>
    %38 = vector.broadcast %37 : vector<1x8x8xf32> to vector<2x8x8xf32>
    %cst_14 = arith.constant 0.000000e+00 : f32
    %39 = vector.broadcast %cst_14 : f32 to vector<16x32xf32>
    %40 = vector.extract_strided_slice %29 {offsets = [0, 0, 0], sizes = [2, 8, 8], strides = [1, 1, 1]} : vector<2x8x96xbf16> to vector<2x8x8xbf16>
    %41 = vector.extract_strided_slice %29 {offsets = [0, 0, 32], sizes = [2, 8, 8], strides = [1, 1, 1]} : vector<2x8x96xbf16> to vector<2x8x8xbf16>
    %42 = vector.extract_strided_slice %29 {offsets = [0, 0, 64], sizes = [2, 8, 8], strides = [1, 1, 1]} : vector<2x8x96xbf16> to vector<2x8x8xbf16>
    "tpu.trace_start"() <{level = 10 : i32, message = "btd,bsd->bts"}> : () -> ()
    %cst_15 = arith.constant dense<0.000000e+00> : vector<2x8x8xf32>
    %43 = tpu.matmul %40, %41, %cst_15 {dimension_numbers = #tpu.dot_dimension_numbers<[2], [2], [1], [1], [0, 0, 0, 1, 1, 1], [0], [0]>} : vector<2x8x8xbf16>, vector<2x8x8xbf16>, vector<2x8x8xf32> -> vector<2x8x8xf32>
    "tpu.trace_stop"() : () -> ()
    %44 = arith.addf %43, %38 : vector<2x8x8xf32>
    %cst_16 = arith.constant dense<0xFF800000> : vector<2x8xf32>
    %45 = vector.multi_reduction <maximumf>, %44, %cst_16 [2] : vector<2x8x8xf32> to vector<2x8xf32>
    %46 = vector.shape_cast %45 : vector<2x8xf32> to vector<2x8x1xf32>
    %47 = vector.broadcast %46 : vector<2x8x1xf32> to vector<2x8x8xf32>
    %48 = arith.subf %44, %47 : vector<2x8x8xf32>
    %49 = math.exp %48 : vector<2x8x8xf32>
    %cst_17 = arith.constant dense<0.000000e+00> : vector<2x8xf32>
    %50 = vector.multi_reduction <add>, %49, %cst_17 [2] : vector<2x8x8xf32> to vector<2x8xf32>
    %51 = vector.shape_cast %50 : vector<2x8xf32> to vector<2x8x1xf32>
    %52 = tpu.reciprocal %51 {approx = true} : vector<2x8x1xf32> -> vector<2x8x1xf32>
    %53 = vector.broadcast %52 : vector<2x8x1xf32> to vector<2x8x8xf32>
    %54 = arith.mulf %49, %53 : vector<2x8x8xf32>
    %55 = arith.truncf %54 : vector<2x8x8xf32> to vector<2x8x8xbf16>
    "tpu.trace_start"() <{level = 10 : i32, message = "bts,bsd->btd"}> : () -> ()
    %cst_18 = arith.constant dense<0.000000e+00> : vector<2x8x8xf32>
    %56 = tpu.matmul %55, %42, %cst_18 {dimension_numbers = #tpu.dot_dimension_numbers<[2], [1], [1], [2], [0, 0, 0, 1, 1, 2], [0], [0]>} : vector<2x8x8xbf16>, vector<2x8x8xbf16>, vector<2x8x8xf32> -> vector<2x8x8xf32>
    "tpu.trace_stop"() : () -> ()
    %57 = vector.shape_cast %56 : vector<2x8x8xf32> to vector<16x8xf32>
    %58 = arith.truncf %57 : vector<16x8xf32> to vector<16x8xbf16>
    %c0_19 = arith.constant 0 : index
    %c0_20 = arith.constant 0 : index
    %c0_21 = arith.constant 0 : index
    %59 = vector.load %arg5[%c0_19, %c0_20, %c0_21] : memref<4x8x32xbf16, #tpu.memory_space<vmem>>, vector<1x8x32xbf16>
    %60 = vector.shape_cast %59 : vector<1x8x32xbf16> to vector<8x32xbf16>
    %cst_22 = arith.constant dense<0.000000e+00> : vector<16x32xf32>
    %61 = tpu.matmul %58, %60, %cst_22 {dimension_numbers = #tpu.dot_dimension_numbers<[1], [0], [0], [1], [0, 0, 1, 1], [], []>} : vector<16x8xbf16>, vector<8x32xbf16>, vector<16x32xf32> -> vector<16x32xf32>
    %62 = arith.addf %39, %61 : vector<16x32xf32>
    %63 = vector.extract_strided_slice %29 {offsets = [0, 0, 8], sizes = [2, 8, 8], strides = [1, 1, 1]} : vector<2x8x96xbf16> to vector<2x8x8xbf16>
    %64 = vector.extract_strided_slice %29 {offsets = [0, 0, 40], sizes = [2, 8, 8], strides = [1, 1, 1]} : vector<2x8x96xbf16> to vector<2x8x8xbf16>
    %65 = vector.extract_strided_slice %29 {offsets = [0, 0, 72], sizes = [2, 8, 8], strides = [1, 1, 1]} : vector<2x8x96xbf16> to vector<2x8x8xbf16>
    "tpu.trace_start"() <{level = 10 : i32, message = "btd,bsd->bts"}> : () -> ()
    %cst_23 = arith.constant dense<0.000000e+00> : vector<2x8x8xf32>
    %66 = tpu.matmul %63, %64, %cst_23 {dimension_numbers = #tpu.dot_dimension_numbers<[2], [2], [1], [1], [0, 0, 0, 1, 1, 1], [0], [0]>} : vector<2x8x8xbf16>, vector<2x8x8xbf16>, vector<2x8x8xf32> -> vector<2x8x8xf32>
    "tpu.trace_stop"() : () -> ()
    %67 = arith.addf %66, %38 : vector<2x8x8xf32>
    %cst_24 = arith.constant dense<0xFF800000> : vector<2x8xf32>
    %68 = vector.multi_reduction <maximumf>, %67, %cst_24 [2] : vector<2x8x8xf32> to vector<2x8xf32>
    %69 = vector.shape_cast %68 : vector<2x8xf32> to vector<2x8x1xf32>
    %70 = vector.broadcast %69 : vector<2x8x1xf32> to vector<2x8x8xf32>
    %71 = arith.subf %67, %70 : vector<2x8x8xf32>
    %72 = math.exp %71 : vector<2x8x8xf32>
    %cst_25 = arith.constant dense<0.000000e+00> : vector<2x8xf32>
    %73 = vector.multi_reduction <add>, %72, %cst_25 [2] : vector<2x8x8xf32> to vector<2x8xf32>
    %74 = vector.shape_cast %73 : vector<2x8xf32> to vector<2x8x1xf32>
    %75 = tpu.reciprocal %74 {approx = true} : vector<2x8x1xf32> -> vector<2x8x1xf32>
    %76 = vector.broadcast %75 : vector<2x8x1xf32> to vector<2x8x8xf32>
    %77 = arith.mulf %72, %76 : vector<2x8x8xf32>
    %78 = arith.truncf %77 : vector<2x8x8xf32> to vector<2x8x8xbf16>
    "tpu.trace_start"() <{level = 10 : i32, message = "bts,bsd->btd"}> : () -> ()
    %cst_26 = arith.constant dense<0.000000e+00> : vector<2x8x8xf32>
    %79 = tpu.matmul %78, %65, %cst_26 {dimension_numbers = #tpu.dot_dimension_numbers<[2], [1], [1], [2], [0, 0, 0, 1, 1, 2], [0], [0]>} : vector<2x8x8xbf16>, vector<2x8x8xbf16>, vector<2x8x8xf32> -> vector<2x8x8xf32>
    "tpu.trace_stop"() : () -> ()
    %80 = vector.shape_cast %79 : vector<2x8x8xf32> to vector<16x8xf32>
    %81 = arith.truncf %80 : vector<16x8xf32> to vector<16x8xbf16>
    %c1 = arith.constant 1 : index
    %c0_27 = arith.constant 0 : index
    %c0_28 = arith.constant 0 : index
    %82 = vector.load %arg5[%c1, %c0_27, %c0_28] : memref<4x8x32xbf16, #tpu.memory_space<vmem>>, vector<1x8x32xbf16>
    %83 = vector.shape_cast %82 : vector<1x8x32xbf16> to vector<8x32xbf16>
    %cst_29 = arith.constant dense<0.000000e+00> : vector<16x32xf32>
    %84 = tpu.matmul %81, %83, %cst_29 {dimension_numbers = #tpu.dot_dimension_numbers<[1], [0], [0], [1], [0, 0, 1, 1], [], []>} : vector<16x8xbf16>, vector<8x32xbf16>, vector<16x32xf32> -> vector<16x32xf32>
    %85 = arith.addf %62, %84 : vector<16x32xf32>
    %86 = vector.extract_strided_slice %29 {offsets = [0, 0, 16], sizes = [2, 8, 8], strides = [1, 1, 1]} : vector<2x8x96xbf16> to vector<2x8x8xbf16>
    %87 = vector.extract_strided_slice %29 {offsets = [0, 0, 48], sizes = [2, 8, 8], strides = [1, 1, 1]} : vector<2x8x96xbf16> to vector<2x8x8xbf16>
    %88 = vector.extract_strided_slice %29 {offsets = [0, 0, 80], sizes = [2, 8, 8], strides = [1, 1, 1]} : vector<2x8x96xbf16> to vector<2x8x8xbf16>
    "tpu.trace_start"() <{level = 10 : i32, message = "btd,bsd->bts"}> : () -> ()
    %cst_30 = arith.constant dense<0.000000e+00> : vector<2x8x8xf32>
    %89 = tpu.matmul %86, %87, %cst_30 {dimension_numbers = #tpu.dot_dimension_numbers<[2], [2], [1], [1], [0, 0, 0, 1, 1, 1], [0], [0]>} : vector<2x8x8xbf16>, vector<2x8x8xbf16>, vector<2x8x8xf32> -> vector<2x8x8xf32>
    "tpu.trace_stop"() : () -> ()
    %90 = arith.addf %89, %38 : vector<2x8x8xf32>
    %cst_31 = arith.constant dense<0xFF800000> : vector<2x8xf32>
    %91 = vector.multi_reduction <maximumf>, %90, %cst_31 [2] : vector<2x8x8xf32> to vector<2x8xf32>
    %92 = vector.shape_cast %91 : vector<2x8xf32> to vector<2x8x1xf32>
    %93 = vector.broadcast %92 : vector<2x8x1xf32> to vector<2x8x8xf32>
    %94 = arith.subf %90, %93 : vector<2x8x8xf32>
    %95 = math.exp %94 : vector<2x8x8xf32>
    %cst_32 = arith.constant dense<0.000000e+00> : vector<2x8xf32>
    %96 = vector.multi_reduction <add>, %95, %cst_32 [2] : vector<2x8x8xf32> to vector<2x8xf32>
    %97 = vector.shape_cast %96 : vector<2x8xf32> to vector<2x8x1xf32>
    %98 = tpu.reciprocal %97 {approx = true} : vector<2x8x1xf32> -> vector<2x8x1xf32>
    %99 = vector.broadcast %98 : vector<2x8x1xf32> to vector<2x8x8xf32>
    %100 = arith.mulf %95, %99 : vector<2x8x8xf32>
    %101 = arith.truncf %100 : vector<2x8x8xf32> to vector<2x8x8xbf16>
    "tpu.trace_start"() <{level = 10 : i32, message = "bts,bsd->btd"}> : () -> ()
    %cst_33 = arith.constant dense<0.000000e+00> : vector<2x8x8xf32>
    %102 = tpu.matmul %101, %88, %cst_33 {dimension_numbers = #tpu.dot_dimension_numbers<[2], [1], [1], [2], [0, 0, 0, 1, 1, 2], [0], [0]>} : vector<2x8x8xbf16>, vector<2x8x8xbf16>, vector<2x8x8xf32> -> vector<2x8x8xf32>
    "tpu.trace_stop"() : () -> ()
    %103 = vector.shape_cast %102 : vector<2x8x8xf32> to vector<16x8xf32>
    %104 = arith.truncf %103 : vector<16x8xf32> to vector<16x8xbf16>
    %c2 = arith.constant 2 : index
    %c0_34 = arith.constant 0 : index
    %c0_35 = arith.constant 0 : index
    %105 = vector.load %arg5[%c2, %c0_34, %c0_35] : memref<4x8x32xbf16, #tpu.memory_space<vmem>>, vector<1x8x32xbf16>
    %106 = vector.shape_cast %105 : vector<1x8x32xbf16> to vector<8x32xbf16>
    %cst_36 = arith.constant dense<0.000000e+00> : vector<16x32xf32>
    %107 = tpu.matmul %104, %106, %cst_36 {dimension_numbers = #tpu.dot_dimension_numbers<[1], [0], [0], [1], [0, 0, 1, 1], [], []>} : vector<16x8xbf16>, vector<8x32xbf16>, vector<16x32xf32> -> vector<16x32xf32>
    %108 = arith.addf %85, %107 : vector<16x32xf32>
    %109 = vector.extract_strided_slice %29 {offsets = [0, 0, 24], sizes = [2, 8, 8], strides = [1, 1, 1]} : vector<2x8x96xbf16> to vector<2x8x8xbf16>
    %110 = vector.extract_strided_slice %29 {offsets = [0, 0, 56], sizes = [2, 8, 8], strides = [1, 1, 1]} : vector<2x8x96xbf16> to vector<2x8x8xbf16>
    %111 = vector.extract_strided_slice %29 {offsets = [0, 0, 88], sizes = [2, 8, 8], strides = [1, 1, 1]} : vector<2x8x96xbf16> to vector<2x8x8xbf16>
    "tpu.trace_start"() <{level = 10 : i32, message = "btd,bsd->bts"}> : () -> ()
    %cst_37 = arith.constant dense<0.000000e+00> : vector<2x8x8xf32>
    %112 = tpu.matmul %109, %110, %cst_37 {dimension_numbers = #tpu.dot_dimension_numbers<[2], [2], [1], [1], [0, 0, 0, 1, 1, 1], [0], [0]>} : vector<2x8x8xbf16>, vector<2x8x8xbf16>, vector<2x8x8xf32> -> vector<2x8x8xf32>
    "tpu.trace_stop"() : () -> ()
    %113 = arith.addf %112, %38 : vector<2x8x8xf32>
    %cst_38 = arith.constant dense<0xFF800000> : vector<2x8xf32>
    %114 = vector.multi_reduction <maximumf>, %113, %cst_38 [2] : vector<2x8x8xf32> to vector<2x8xf32>
    %115 = vector.shape_cast %114 : vector<2x8xf32> to vector<2x8x1xf32>
    %116 = vector.broadcast %115 : vector<2x8x1xf32> to vector<2x8x8xf32>
    %117 = arith.subf %113, %116 : vector<2x8x8xf32>
    %118 = math.exp %117 : vector<2x8x8xf32>
    %cst_39 = arith.constant dense<0.000000e+00> : vector<2x8xf32>
    %119 = vector.multi_reduction <add>, %118, %cst_39 [2] : vector<2x8x8xf32> to vector<2x8xf32>
    %120 = vector.shape_cast %119 : vector<2x8xf32> to vector<2x8x1xf32>
    %121 = tpu.reciprocal %120 {approx = true} : vector<2x8x1xf32> -> vector<2x8x1xf32>
    %122 = vector.broadcast %121 : vector<2x8x1xf32> to vector<2x8x8xf32>
    %123 = arith.mulf %118, %122 : vector<2x8x8xf32>
    %124 = arith.truncf %123 : vector<2x8x8xf32> to vector<2x8x8xbf16>
    "tpu.trace_start"() <{level = 10 : i32, message = "bts,bsd->btd"}> : () -> ()
    %cst_40 = arith.constant dense<0.000000e+00> : vector<2x8x8xf32>
    %125 = tpu.matmul %124, %111, %cst_40 {dimension_numbers = #tpu.dot_dimension_numbers<[2], [1], [1], [2], [0, 0, 0, 1, 1, 2], [0], [0]>} : vector<2x8x8xbf16>, vector<2x8x8xbf16>, vector<2x8x8xf32> -> vector<2x8x8xf32>
    "tpu.trace_stop"() : () -> ()
    %126 = vector.shape_cast %125 : vector<2x8x8xf32> to vector<16x8xf32>
    %127 = arith.truncf %126 : vector<16x8xf32> to vector<16x8xbf16>
    %c3 = arith.constant 3 : index
    %c0_41 = arith.constant 0 : index
    %c0_42 = arith.constant 0 : index
    %128 = vector.load %arg5[%c3, %c0_41, %c0_42] : memref<4x8x32xbf16, #tpu.memory_space<vmem>>, vector<1x8x32xbf16>
    %129 = vector.shape_cast %128 : vector<1x8x32xbf16> to vector<8x32xbf16>
    %cst_43 = arith.constant dense<0.000000e+00> : vector<16x32xf32>
    %130 = tpu.matmul %127, %129, %cst_43 {dimension_numbers = #tpu.dot_dimension_numbers<[1], [0], [0], [1], [0, 0, 1, 1], [], []>} : vector<16x8xbf16>, vector<8x32xbf16>, vector<16x32xf32> -> vector<16x32xf32>
    %131 = arith.addf %108, %130 : vector<16x32xf32>
    %c0_44 = arith.constant 0 : index
    %c0_45 = arith.constant 0 : index
    %132 = vector.load %arg6[%c0_44, %c0_45] : memref<1x32xf32, #tpu.memory_space<vmem>>, vector<1x32xf32>
    %133 = vector.broadcast %132 : vector<1x32xf32> to vector<16x32xf32>
    %134 = arith.addf %131, %133 : vector<16x32xf32>
    %135 = arith.addf %0, %134 : vector<16x32xf32>
    %c0_46 = arith.constant 0 : index
    %c0_47 = arith.constant 0 : index
    %136 = vector.load %arg7[%c0_46, %c0_47] : memref<1x32xf32, #tpu.memory_space<vmem>>, vector<1x32xf32>
    %c0_48 = arith.constant 0 : index
    %c0_49 = arith.constant 0 : index
    %137 = vector.load %arg8[%c0_48, %c0_49] : memref<1x32xf32, #tpu.memory_space<vmem>>, vector<1x32xf32>
    %cst_50 = arith.constant dense<0.000000e+00> : vector<16xf32>
    %138 = vector.multi_reduction <add>, %135, %cst_50 [1] : vector<16x32xf32> to vector<16xf32>
    %139 = vector.shape_cast %138 : vector<16xf32> to vector<16x1xf32>
    %cst_51 = arith.constant 3.200000e+01 : f32
    %140 = vector.broadcast %cst_51 : f32 to vector<16x1xf32>
    %141 = arith.divf %139, %140 : vector<16x1xf32>
    %142 = vector.broadcast %141 : vector<16x1xf32> to vector<16x32xf32>
    %143 = arith.subf %135, %142 : vector<16x32xf32>
    %144 = arith.mulf %143, %143 : vector<16x32xf32>
    %cst_52 = arith.constant dense<0.000000e+00> : vector<16xf32>
    %145 = vector.multi_reduction <add>, %144, %cst_52 [1] : vector<16x32xf32> to vector<16xf32>
    %146 = vector.shape_cast %145 : vector<16xf32> to vector<16x1xf32>
    %cst_53 = arith.constant 3.200000e+01 : f32
    %147 = vector.broadcast %cst_53 : f32 to vector<16x1xf32>
    %148 = arith.divf %146, %147 : vector<16x1xf32>
    %149 = vector.broadcast %141 : vector<16x1xf32> to vector<16x32xf32>
    %150 = arith.subf %135, %149 : vector<16x32xf32>
    %cst_54 = arith.constant 9.99999974E-6 : f32
    %151 = vector.broadcast %cst_54 : f32 to vector<16x1xf32>
    %152 = arith.addf %148, %151 : vector<16x1xf32>
    %153 = math.rsqrt %152 : vector<16x1xf32>
    %154 = vector.broadcast %153 : vector<16x1xf32> to vector<16x32xf32>
    %155 = arith.mulf %150, %154 : vector<16x32xf32>
    %156 = vector.broadcast %136 : vector<1x32xf32> to vector<16x32xf32>
    %157 = arith.mulf %155, %156 : vector<16x32xf32>
    %158 = vector.broadcast %137 : vector<1x32xf32> to vector<16x32xf32>
    %159 = arith.addf %157, %158 : vector<16x32xf32>
    %160 = arith.truncf %159 : vector<16x32xf32> to vector<16x32xbf16>
    %c0_55 = arith.constant 0 : index
    %c0_56 = arith.constant 0 : index
    %161 = vector.load %arg9[%c0_55, %c0_56] : memref<32x128xbf16, #tpu.memory_space<vmem>>, vector<32x128xbf16>
    %cst_57 = arith.constant dense<0.000000e+00> : vector<16x128xf32>
    %162 = tpu.matmul %160, %161, %cst_57 {dimension_numbers = #tpu.dot_dimension_numbers<[1], [0], [0], [1], [0, 0, 1, 1], [], []>} : vector<16x32xbf16>, vector<32x128xbf16>, vector<16x128xf32> -> vector<16x128xf32>
    %c0_58 = arith.constant 0 : index
    %c0_59 = arith.constant 0 : index
    %163 = vector.load %arg10[%c0_58, %c0_59] : memref<1x128xf32, #tpu.memory_space<vmem>>, vector<1x128xf32>
    %164 = vector.broadcast %163 : vector<1x128xf32> to vector<16x128xf32>
    %165 = arith.addf %162, %164 : vector<16x128xf32>
    %cst_60 = arith.constant 0.000000e+00 : f32
    %166 = vector.broadcast %cst_60 : f32 to vector<16x128xf32>
    %167 = arith.maximumf %165, %166 : vector<16x128xf32>
    %168 = arith.truncf %167 : vector<16x128xf32> to vector<16x128xbf16>
    %c0_61 = arith.constant 0 : index
    %c0_62 = arith.constant 0 : index
    %169 = vector.load %arg11[%c0_61, %c0_62] : memref<128x32xbf16, #tpu.memory_space<vmem>>, vector<128x32xbf16>
    %cst_63 = arith.constant dense<0.000000e+00> : vector<16x32xf32>
    %170 = tpu.matmul %168, %169, %cst_63 {dimension_numbers = #tpu.dot_dimension_numbers<[1], [0], [0], [1], [0, 0, 1, 1], [], []>} : vector<16x128xbf16>, vector<128x32xbf16>, vector<16x32xf32> -> vector<16x32xf32>
    %c0_64 = arith.constant 0 : index
    %c0_65 = arith.constant 0 : index
    %171 = vector.load %arg12[%c0_64, %c0_65] : memref<1x32xf32, #tpu.memory_space<vmem>>, vector<1x32xf32>
    %172 = vector.broadcast %171 : vector<1x32xf32> to vector<16x32xf32>
    %173 = arith.addf %170, %172 : vector<16x32xf32>
    %174 = arith.addf %135, %173 : vector<16x32xf32>
    %c0_66 = arith.constant 0 : index
    %c0_67 = arith.constant 0 : index
    %175 = vector.load %arg13[%c0_66, %c0_67] : memref<16x32xf32, #tpu.memory_space<vmem>>, vector<16x32xf32>
    tpu.vector_store %arg13[%c0_66, %c0_67], %174 {strides = array<i32>} : memref<16x32xf32, #tpu.memory_space<vmem>>, vector<16x32xf32>,
    return
  }
  func.func @transform_0(%arg0: i32) -> (i32, i32) {
    %c0_i32 = arith.constant 0 : i32
    %c0_i32_0 = arith.constant 0 : i32
    return %arg0, %c0_i32 : i32, i32
  }
  func.func @transform_1(%arg0: i32) -> (i32, i32) {
    %c0_i32 = arith.constant 0 : i32
    %c0_i32_0 = arith.constant 0 : i32
    %c0_i32_1 = arith.constant 0 : i32
    return %c0_i32, %c0_i32_0 : i32, i32
  }
  func.func @transform_2(%arg0: i32) -> (i32, i32) {
    %c0_i32 = arith.constant 0 : i32
    %c0_i32_0 = arith.constant 0 : i32
    %c0_i32_1 = arith.constant 0 : i32
    return %c0_i32, %c0_i32_0 : i32, i32
  }
  func.func @transform_3(%arg0: i32) -> (i32, i32) {
    %c0_i32 = arith.constant 0 : i32
    %c0_i32_0 = arith.constant 0 : i32
    %c0_i32_1 = arith.constant 0 : i32
    return %c0_i32, %c0_i32_0 : i32, i32
  }
  func.func @transform_4(%arg0: i32) -> (i32, i32, i32) {
    %c0_i32 = arith.constant 0 : i32
    %c0_i32_0 = arith.constant 0 : i32
    %c0_i32_1 = arith.constant 0 : i32
    %c0_i32_2 = arith.constant 0 : i32
    return %c0_i32, %c0_i32_0, %c0_i32_1 : i32, i32, i32
  }
  func.func @transform_5(%arg0: i32) -> (i32, i32) {
    %c0_i32 = arith.constant 0 : i32
    %c0_i32_0 = arith.constant 0 : i32
    %c0_i32_1 = arith.constant 0 : i32
    return %c0_i32, %c0_i32_0 : i32, i32
  }
  func.func @transform_6(%arg0: i32) -> (i32, i32) {
    %c0_i32 = arith.constant 0 : i32
    %c0_i32_0 = arith.constant 0 : i32
    %c0_i32_1 = arith.constant 0 : i32
    return %c0_i32, %c0_i32_0 : i32, i32
  }
  func.func @transform_7(%arg0: i32) -> (i32, i32) {
    %c0_i32 = arith.constant 0 : i32
    %c0_i32_0 = arith.constant 0 : i32
    %c0_i32_1 = arith.constant 0 : i32
    return %c0_i32, %c0_i32_0 : i32, i32
  }
  func.func @transform_8(%arg0: i32) -> (i32, i32) {
    %c0_i32 = arith.constant 0 : i32
    %c0_i32_0 = arith.constant 0 : i32
    %c0_i32_1 = arith.constant 0 : i32
    return %c0_i32, %c0_i32_0 : i32, i32
  }
  func.func @transform_9(%arg0: i32) -> (i32, i32) {
    %c0_i32 = arith.constant 0 : i32
    %c0_i32_0 = arith.constant 0 : i32
    %c0_i32_1 = arith.constant 0 : i32
    return %c0_i32, %c0_i32_0 : i32, i32
  }
  func.func @transform_10(%arg0: i32) -> (i32, i32) {
    %c0_i32 = arith.constant 0 : i32
    %c0_i32_0 = arith.constant 0 : i32
    %c0_i32_1 = arith.constant 0 : i32
    return %c0_i32, %c0_i32_0 : i32, i32
  }
  func.func @transform_11(%arg0: i32) -> (i32, i32) {
    %c0_i32 = arith.constant 0 : i32
    %c0_i32_0 = arith.constant 0 : i32
    %c0_i32_1 = arith.constant 0 : i32
    return %c0_i32, %c0_i32_0 : i32, i32
  }
  func.func @transform_12(%arg0: i32) -> (i32, i32) {
    %c0_i32 = arith.constant 0 : i32
    %c0_i32_0 = arith.constant 0 : i32
    return %arg0, %c0_i32 : i32, i32
  }
}

</mosaic_0001>

<llo_original>
// kernel: tpu_custom_call.1
$region0: #{tpu_custom_call.1}
  #allocation0 [shape = 'u32[]', space=smem, size = 0x4, offset = 0x4, fixed_abs, tag = 'smem constant byte address 0x4 - core index']
  #allocation1 [shape = 'u32[72,128]{1,0:T(1,128)}', space=vmem, size = 0x9000, scoped, tag = 'internal scratch']
  %s0 = inlined_call_operand.vmem [shape: f32[16,32], index: 0, kind: input, shape index: {}]
  %s1 = inlined_call_operand.vmem [shape: f32[1,32], index: 1, kind: input, shape index: {}]
  %s2 = inlined_call_operand.vmem [shape: f32[1,32], index: 2, kind: input, shape index: {}]
  %s3 = inlined_call_operand.vmem [shape: bf16[32,96], index: 3, kind: input, shape index: {}]
  %s4 = inlined_call_operand.vmem [shape: bf16[4,8,32], index: 4, kind: input, shape index: {}]
  %s5 = inlined_call_operand.vmem [shape: f32[1,32], index: 5, kind: input, shape index: {}]
  %s6 = inlined_call_operand.vmem [shape: f32[1,32], index: 6, kind: input, shape index: {}]
  %s7 = inlined_call_operand.vmem [shape: f32[1,32], index: 7, kind: input, shape index: {}]
  %s8 = inlined_call_operand.vmem [shape: bf16[32,128], index: 8, kind: input, shape index: {}]
  %s9 = inlined_call_operand.vmem [shape: f32[1,128], index: 9, kind: input, shape index: {}]
  %s10 = inlined_call_operand.vmem [shape: bf16[128,32], index: 10, kind: input, shape index: {}]
  %s11 = inlined_call_operand.vmem [shape: f32[1,32], index: 11, kind: input, shape index: {}]
  %s12 = inlined_call_operand.hbm [shape: f32[16,32], index: 12, kind: output, shape index: {}]
  %s13 = sld [smem:[#allocation0]]
  $region58: #{tpu_custom_call.1} parent=0
    _
  %s15 = ssub.s32 1, %s13
  %s16 = scalar_select 0, %s15, %s13
  $region1: #{tpu_custom_call.1} parent=0
    #allocation2 [shape = 'u8[8192]{0}', space=vmem, size = 0x2000, scoped, tag = 'output window, operand 0, single buffered']
    #allocation3 [shape = 's32[1]{0}', space=sflag, size = 0x4, scoped, tag = 'scoped memory for tpu_custom_call.1']
    %17 = vsyncpa [#allocation3], 0
    // Predicated region
    $region2: #{tpu_custom_call.1} parent=1 // pred_check
      _
    $region3: #{tpu_custom_call.1} parent=1 // pred_check_branch
      %19 = sbr.rel (0) target = $region5
    $region4: #{tpu_custom_call.1} parent=1 // pred_region
      _
    $region5: #{tpu_custom_call.1} parent=1 // pred_fallthru
      _
    // Predicated region
    $region6: #{tpu_custom_call.1} parent=1 // pred_check
      _
    $region7: #{tpu_custom_call.1} parent=1 // pred_check_branch
      %21 = sbr.rel (0) target = $region9
    $region8: #{tpu_custom_call.1} parent=1 // pred_region
      _
    $region9: #{tpu_custom_call.1} parent=1 // pred_fallthru
      _
    // Predicated region
    $region10: #{tpu_custom_call.1} parent=1 // pred_check
      _
    $region11: #{tpu_custom_call.1} parent=1 // pred_check_branch
      %23 = sbr.rel (0) target = $region13
    $region12: #{tpu_custom_call.1} parent=1 // pred_region
      _
    $region13: #{tpu_custom_call.1} parent=1 // pred_fallthru
      _
    // Predicated region
    $region14: #{tpu_custom_call.1} parent=1 // pred_check
      _
    $region15: #{tpu_custom_call.1} parent=1 // pred_check_branch
      %25 = sbr.rel (0) target = $region17
    $region16: #{tpu_custom_call.1} parent=1 // pred_region
      _
    $region17: #{tpu_custom_call.1} parent=1 // pred_fallthru
      _
    // Predicated region
    $region18: #{tpu_custom_call.1} parent=1 // pred_check
      _
    $region19: #{tpu_custom_call.1} parent=1 // pred_check_branch
      %27 = sbr.rel (0) target = $region21
    $region20: #{tpu_custom_call.1} parent=1 // pred_region
      _
    $region21: #{tpu_custom_call.1} parent=1 // pred_fallthru
      _
    // Predicated region
    $region22: #{tpu_custom_call.1} parent=1 // pred_check
      _
    $region23: #{tpu_custom_call.1} parent=1 // pred_check_branch
      %29 = sbr.rel (0) target = $region25
    $region24: #{tpu_custom_call.1} parent=1 // pred_region
      _
    $region25: #{tpu_custom_call.1} parent=1 // pred_fallthru
      _
    // Predicated region
    $region26: #{tpu_custom_call.1} parent=1 // pred_check
      _
    $region27: #{tpu_custom_call.1} parent=1 // pred_check_branch
      %31 = sbr.rel (0) target = $region29
    $region28: #{tpu_custom_call.1} parent=1 // pred_region
      _
    $region29: #{tpu_custom_call.1} parent=1 // pred_fallthru
      _
    // Predicated region
    $region30: #{tpu_custom_call.1} parent=1 // pred_check
      _
    $region31: #{tpu_custom_call.1} parent=1 // pred_check_branch
      %33 = sbr.rel (0) target = $region33
    $region32: #{tpu_custom_call.1} parent=1 // pred_region
      _
    $region33: #{tpu_custom_call.1} parent=1 // pred_fallthru
      _
    // Predicated region
    $region34: #{tpu_custom_call.1} parent=1 // pred_check
      _
    $region35: #{tpu_custom_call.1} parent=1 // pred_check_branch
      %35 = sbr.rel (0) target = $region37
    $region36: #{tpu_custom_call.1} parent=1 // pred_region
      _
    $region37: #{tpu_custom_call.1} parent=1 // pred_fallthru
      _
    // Predicated region
    $region38: #{tpu_custom_call.1} parent=1 // pred_check
      _
    $region39: #{tpu_custom_call.1} parent=1 // pred_check_branch
      %37 = sbr.rel (0) target = $region41
    $region40: #{tpu_custom_call.1} parent=1 // pred_region
      _
    $region41: #{tpu_custom_call.1} parent=1 // pred_fallthru
      _
    // Predicated region
    $region42: #{tpu_custom_call.1} parent=1 // pred_check
      _
    $region43: #{tpu_custom_call.1} parent=1 // pred_check_branch
      %39 = sbr.rel (0) target = $region45
    $region44: #{tpu_custom_call.1} parent=1 // pred_region
      _
    $region45: #{tpu_custom_call.1} parent=1 // pred_fallthru
      _
    // Predicated region
    $region46: #{tpu_custom_call.1} parent=1 // pred_check
      _
    $region47: #{tpu_custom_call.1} parent=1 // pred_check_branch
      %41 = sbr.rel (0) target = $region49
    $region48: #{tpu_custom_call.1} parent=1 // pred_region
      _
    $region49: #{tpu_custom_call.1} parent=1 // pred_fallthru
      _
    %v43 = vld [vmem:[%s0] sm:$0xff]
    %v44 = vld [vmem:[%s0 + $0x8] sm:$0xff]
    %v45 = vld [vmem:[%s1] sm:$0x1]
    %v46 = vld [vmem:[%s2] sm:$0x1]
    %vm47 = vcmask 261120
    %v48 = vsel %vm47, %v43, 0.0
    %49 = vadd.xlane.f32.xlu0 %v48
    %v50 = vpop.xlane.xlu0 %49
    %v51 = vsel %vm47, %v44, 0.0
    %52 = vadd.xlane.f32.xlu0 %v51
    %v53 = vpop.xlane.xlu0 %52
    %v54 = vrcp.pop 32.0
    %v55 = vmul.f32 32.0, %v54
    %v56 = vsub.f32 1.0, %v55
    %v57 = vmul.f32 %v54, %v56
    %v58 = vadd.f32 %v54, %v57
    %vm59 = vweird.f32 %v54
    %v60 = vsel %vm59, %v54, %v58
    %v61 = vmul.f32 %v50, %v60
    %v62 = vmul.f32 %v53, %v60
    %v63 = vsub.f32 %v43, %v61
    %v64 = vsub.f32 %v44, %v62
    %v65 = vmul.f32 %v63, %v63
    %v66 = vmul.f32 %v64, %v64
    %v67 = vsel %vm47, %v65, 0.0
    %68 = vadd.xlane.f32.xlu0 %v67
    %v69 = vpop.xlane.xlu0 %68
    %v70 = vsel %vm47, %v66, 0.0
    %71 = vadd.xlane.f32.xlu0 %v70
    %v72 = vpop.xlane.xlu0 %71
    %v73 = vmul.f32 %v69, %v60
    %v74 = vmul.f32 %v72, %v60
    %v75 = vadd.f32 %v73, 1e-05
    %v76 = vadd.f32 %v74, 1e-05
    %v77 = vrsqrt.pop %v75
    %v78 = vmul.f32 %v77, %v75
    %v79 = vmul.f32 %v78, %v77
    %v80 = vmul.f32 0.5, %v79
    %v81 = vsub.f32 1.5, %v80
    %v82 = vmul.f32 %v77, %v81
    %vm83 = vweird.f32 %v75
    %vm84 = vweird.f32 %v77
    %vm85 = vmor %vm83, %vm84
    %v86 = vsel %vm85, %v77, %v82
    %v87 = vrsqrt.pop %v76
    %v88 = vmul.f32 %v87, %v76
    %v89 = vmul.f32 %v88, %v87
    %v90 = vmul.f32 0.5, %v89
    %v91 = vsub.f32 1.5, %v90
    %v92 = vmul.f32 %v87, %v91
    %vm93 = vweird.f32 %v76
    %vm94 = vweird.f32 %v87
    %vm95 = vmor %vm93, %vm94
    %v96 = vsel %vm95, %v87, %v92
    %v97 = vmul.f32 %v63, %v86
    %v98 = vmul.f32 %v64, %v96
    %v100 = vperm.slane %v45, 0
    %v102 = vmul.f32 %v97, %v100
    %v103 = vmul.f32 %v98, %v100
    %v105 = vperm.slane %v46, 0
    %v107 = vadd.f32 %v102, %v105
    %v108 = vadd.f32 %v103, %v105
    %v109 = vpack.c.bf16 %v108, %v107
    %v110 = vld [vmem:[%s3] sm:$0xf]
    %v111 = vld [vmem:[%s3 + $0x4] sm:$0xf]
    %v112 = vld [vmem:[%s3 + $0x8] sm:$0xf]
    %v113 = vld [vmem:[%s3 + $0xc] sm:$0xf]
    %v118 = vunpack.c.l.b16 %v110
    %v119 = vunpack.c.l.b16 %v111
    %v120 = vunpack.c.l.b16 %v112
    %v121 = vunpack.c.l.b16 %v113
    %v122 = vpack.c.b16 %v119, %v118
    %v123 = vpack.c.b16 %v121, %v120
    %v127 = vsel %vm47, %v109, 0
    %129 = vmatpush.bf16.msra.mxu0 0
    %130 = vmatpush.bf16.msra.mxu0 0
    %131 = vmatpush.bf16.msra.mxu0 0
    %132 = vmatpush.bf16.msra.mxu0 0
    %133 = vmatpush.bf16.msra.mxu0 0
    %134 = vmatpush.bf16.msra.mxu0 0
    %135 = vmatpush.bf16.msra.mxu0 %v123
    %136 = vmatpush.bf16.msra.mxu0 %v122
    %137 = vmatmul.bf16.gmra.mxu0 %v127
    %v138 = vpop.f32.mrf.mxu0
    %v139 = vadd.f32 0.0, %v138
    %v140 = vpop.f32.mrf.mxu0
    %v141 = vadd.f32 0.0, %v140
    %142 = vdwg.mxu0
    %v143 = vpack.c.bf16 %v139, %v139
    %v144 = vpack.c.bf16 %v141, %v141
    %v145 = vlaneseq
    %v146 = vshrl.u32 %v145, 7
    %v147 = vlaneseq
    %v148 = vand.u32 %v147, 127
    %vm149 = vcmp.ge.s32.totalorder %v146, %v148
    %v150 = vsel %vm149, 0.0, -1e+30
    %v152 = vunpack.c.l.b16 %v143
    %v153 = vpack.c.b16 %v152, %v152
    %154 = vrot.lane.b32.xlu0 %v153, 96
    %v155 = vpop.permute.xlu0 %154
    %vm156 = vcmask 64512
    %v158 = vsel %vm156, %v143, 0
    %v161 = vsel %vm156, %v155, 0
    %163 = vmatpush.bf16.xpose.msra.mxu0 0
    %164 = vmatpush.bf16.xpose.msra.mxu0 0
    %165 = vmatpush.bf16.xpose.msra.mxu0 0
    %166 = vmatpush.bf16.xpose.msra.mxu0 0
    %167 = vmatpush.bf16.xpose.msra.mxu0 0
    %168 = vmatpush.bf16.xpose.msra.mxu0 0
    %169 = vmatpush.bf16.xpose.msra.mxu0 0
    %170 = vmatpush.bf16.xpose.msra.mxu0 %v161
    %171 = vmatmul.bf16.gmra.mxu0 %v158
    %v172 = vpop.f32.mrf.mxu0
    %v173 = vadd.f32 %v150, %v172
    %v174 = vpop.f32.mrf.mxu0
    %175 = vdwg.mxu0
    %v177 = vunpack.c.l.b16 %v144
    %v178 = vpack.c.b16 %v177, %v177
    %179 = vrot.lane.b32.xlu0 %v178, 96
    %v180 = vpop.permute.xlu0 %179
    %v182 = vsel %vm156, %v144, 0
    %v185 = vsel %vm156, %v180, 0
    %187 = vmatpush.bf16.xpose.msra.mxu0 0
    %188 = vmatpush.bf16.xpose.msra.mxu0 0
    %189 = vmatpush.bf16.xpose.msra.mxu0 0
    %190 = vmatpush.bf16.xpose.msra.mxu0 0
    %191 = vmatpush.bf16.xpose.msra.mxu0 0
    %192 = vmatpush.bf16.xpose.msra.mxu0 0
    %193 = vmatpush.bf16.xpose.msra.mxu0 0
    %194 = vmatpush.bf16.xpose.msra.mxu0 %v185
    %195 = vmatmul.bf16.gmra.mxu0 %v182
    %v196 = vpop.f32.mrf.mxu0
    %v197 = vadd.f32 %v150, %v196
    %v198 = vpop.f32.mrf.mxu0
    %199 = vdwg.mxu0
    %v200 = vsel %vm156, %v173, -inf
    %201 = vmax.xlane.f32.xlu0 %v200
    %v202 = vpop.xlane.xlu0 %201
    %v203 = vsel %vm156, %v197, -inf
    %204 = vmax.xlane.f32.xlu0 %v203
    %v205 = vpop.xlane.xlu0 %204
    %v206 = vsub.f32 %v173, %v202
    %v207 = vsub.f32 %v197, %v205
    %v208 = vmul.f32 %v206, 1.442695
    %v209 = vpow.pop %v208
    %v210 = vmul.f32 %v207, 1.442695
    %v211 = vpow.pop %v210
    %v212 = vsel %vm156, %v209, 0.0
    %213 = vadd.xlane.f32.xlu0 %v212
    %v214 = vpop.xlane.xlu0 %213
    %v215 = vsel %vm156, %v211, 0.0
    %216 = vadd.xlane.f32.xlu0 %v215
    %v217 = vpop.xlane.xlu0 %216
    %v218 = vrcp.pop %v214
    %v219 = vrcp.pop %v217
    %v220 = vmul.f32 %v209, %v218
    %v221 = vmul.f32 %v211, %v219
    %v222 = vpack.c.bf16 %v220, %v220
    %v223 = vpack.c.bf16 %v221, %v221
    %224 = vrot.lane.b32.xlu0 %v153, 64
    %v225 = vpop.permute.xlu0 %224
    %v227 = vsel %vm156, %v222, 0
    %vm229 = vcmask 1043456
    %v231 = vsel %vm229, %v225, 0
    %233 = vmatpush.bf16.msra.mxu0 0
    %234 = vmatpush.bf16.msra.mxu0 0
    %235 = vmatpush.bf16.msra.mxu0 0
    %236 = vmatpush.bf16.msra.mxu0 0
    %237 = vmatpush.bf16.msra.mxu0 0
    %238 = vmatpush.bf16.msra.mxu0 0
    %239 = vmatpush.bf16.msra.mxu0 0
    %240 = vmatpush.bf16.msra.mxu0 %v231
    %241 = vmatmul.bf16.gmra.mxu0 %v227
    %v242 = vpop.f32.mrf.mxu0
    %v243 = vadd.f32 0.0, %v242
    %v244 = vpop.f32.mrf.mxu0
    %245 = vdwg.mxu0
    %246 = vrot.lane.b32.xlu0 %v178, 64
    %v247 = vpop.permute.xlu0 %246
    %v249 = vsel %vm156, %v223, 0
    %v252 = vsel %vm229, %v247, 0
    %254 = vmatpush.bf16.msra.mxu0 0
    %255 = vmatpush.bf16.msra.mxu0 0
    %256 = vmatpush.bf16.msra.mxu0 0
    %257 = vmatpush.bf16.msra.mxu0 0
    %258 = vmatpush.bf16.msra.mxu0 0
    %259 = vmatpush.bf16.msra.mxu0 0
    %260 = vmatpush.bf16.msra.mxu0 0
    %261 = vmatpush.bf16.msra.mxu0 %v252
    %262 = vmatmul.bf16.gmra.mxu0 %v249
    %v263 = vpop.f32.mrf.mxu0
    %v264 = vadd.f32 0.0, %v263
    %v265 = vpop.f32.mrf.mxu0
    %266 = vdwg.mxu0
    %v267 = vpack.c.bf16 %v264, %v243
    %v268 = vld [vmem:[%s4] sm:$0xf]
    %269 = vrot.lane.b32.xlu0 %v153, 120
    %v270 = vpop.permute.xlu0 %269
    %271 = vrot.lane.b32.xlu0 %v153, 88
    %v272 = vpop.permute.xlu0 %271
    %v274 = vsel %vm156, %v270, 0
    %v277 = vsel %vm156, %v272, 0
    %279 = vmatpush.bf16.xpose.msra.mxu0 0
    %280 = vmatpush.bf16.xpose.msra.mxu0 0
    %281 = vmatpush.bf16.xpose.msra.mxu0 0
    %282 = vmatpush.bf16.xpose.msra.mxu0 0
    %283 = vmatpush.bf16.xpose.msra.mxu0 0
    %284 = vmatpush.bf16.xpose.msra.mxu0 0
    %285 = vmatpush.bf16.xpose.msra.mxu0 0
    %286 = vmatpush.bf16.xpose.msra.mxu0 %v277
    %287 = vmatmul.bf16.gmra.mxu0 %v274
    %v288 = vpop.f32.mrf.mxu0
    %v289 = vadd.f32 %v150, %v288
    %v290 = vpop.f32.mrf.mxu0
    %291 = vdwg.mxu0
    %292 = vrot.lane.b32.xlu0 %v178, 120
    %v293 = vpop.permute.xlu0 %292
    %294 = vrot.lane.b32.xlu0 %v178, 88
    %v295 = vpop.permute.xlu0 %294
    %v297 = vsel %vm156, %v293, 0
    %v300 = vsel %vm156, %v295, 0
    %302 = vmatpush.bf16.xpose.msra.mxu0 0
    %303 = vmatpush.bf16.xpose.msra.mxu0 0
    %304 = vmatpush.bf16.xpose.msra.mxu0 0
    %305 = vmatpush.bf16.xpose.msra.mxu0 0
    %306 = vmatpush.bf16.xpose.msra.mxu0 0
    %307 = vmatpush.bf16.xpose.msra.mxu0 0
    %308 = vmatpush.bf16.xpose.msra.mxu0 0
    %309 = vmatpush.bf16.xpose.msra.mxu0 %v300
    %310 = vmatmul.bf16.gmra.mxu0 %v297
    %v311 = vpop.f32.mrf.mxu0
    %v312 = vadd.f32 %v150, %v311
    %v313 = vpop.f32.mrf.mxu0
    %314 = vdwg.mxu0
    %v315 = vsel %vm156, %v289, -inf
    %316 = vmax.xlane.f32.xlu0 %v315
    %v317 = vpop.xlane.xlu0 %316
    %v318 = vsel %vm156, %v312, -inf
    %319 = vmax.xlane.f32.xlu0 %v318
    %v320 = vpop.xlane.xlu0 %319
    %v321 = vsub.f32 %v289, %v317
    %v322 = vsub.f32 %v312, %v320
    %v323 = vmul.f32 %v321, 1.442695
    %v324 = vpow.pop %v323
    %v325 = vmul.f32 %v322, 1.442695
    %v326 = vpow.pop %v325
    %v327 = vsel %vm156, %v324, 0.0
    %328 = vadd.xlane.f32.xlu0 %v327
    %v329 = vpop.xlane.xlu0 %328
    %v330 = vsel %vm156, %v326, 0.0
    %331 = vadd.xlane.f32.xlu0 %v330
    %v332 = vpop.xlane.xlu0 %331
    %v333 = vrcp.pop %v329
    %v334 = vrcp.pop %v332
    %v335 = vmul.f32 %v324, %v333
    %v336 = vmul.f32 %v326, %v334
    %v337 = vpack.c.bf16 %v335, %v335
    %v338 = vpack.c.bf16 %v336, %v336
    %339 = vrot.lane.b32.xlu0 %v153, 56
    %v340 = vpop.permute.xlu0 %339
    %v342 = vsel %vm156, %v337, 0
    %v345 = vsel %vm229, %v340, 0
    %347 = vmatpush.bf16.msra.mxu0 0
    %348 = vmatpush.bf16.msra.mxu0 0
    %349 = vmatpush.bf16.msra.mxu0 0
    %350 = vmatpush.bf16.msra.mxu0 0
    %351 = vmatpush.bf16.msra.mxu0 0
    %352 = vmatpush.bf16.msra.mxu0 0
    %353 = vmatpush.bf16.msra.mxu0 0
    %354 = vmatpush.bf16.msra.mxu0 %v345
    %355 = vmatmul.bf16.gmra.mxu0 %v342
    %v356 = vpop.f32.mrf.mxu0
    %v357 = vadd.f32 0.0, %v356
    %v358 = vpop.f32.mrf.mxu0
    %359 = vdwg.mxu0
    %360 = vrot.lane.b32.xlu0 %v178, 56
    %v361 = vpop.permute.xlu0 %360
    %v363 = vsel %vm156, %v338, 0
    %v366 = vsel %vm229, %v361, 0
    %368 = vmatpush.bf16.msra.mxu0 0
    %369 = vmatpush.bf16.msra.mxu0 0
    %370 = vmatpush.bf16.msra.mxu0 0
    %371 = vmatpush.bf16.msra.mxu0 0
    %372 = vmatpush.bf16.msra.mxu0 0
    %373 = vmatpush.bf16.msra.mxu0 0
    %374 = vmatpush.bf16.msra.mxu0 0
    %375 = vmatpush.bf16.msra.mxu0 %v366
    %376 = vmatmul.bf16.gmra.mxu0 %v363
    %v377 = vpop.f32.mrf.mxu0
    %v378 = vadd.f32 0.0, %v377
    %v379 = vpop.f32.mrf.mxu0
    %380 = vdwg.mxu0
    %v381 = vpack.c.bf16 %v378, %v357
    %s382 = scalar_lea.vmem %s4, 4
    %v383 = vld [vmem:[%s382] sm:$0xf]
    %v385 = vsel %vm156, %v381, 0
    %v388 = vsel %vm229, %v383, 0
    %390 = vmatpush.bf16.msra.mxu0 0
    %391 = vmatpush.bf16.msra.mxu0 0
    %392 = vmatpush.bf16.msra.mxu0 0
    %393 = vmatpush.bf16.msra.mxu0 0
    %394 = vmatpush.bf16.msra.mxu0 0
    %395 = vmatpush.bf16.msra.mxu0 0
    %396 = vmatpush.bf16.msra.mxu0 0
    %397 = vmatpush.bf16.msra.mxu0 %v388
    %398 = vmatmul.bf16.gmra.mxu0 %v385
    %v399 = vpop.f32.mrf.mxu0
    %v400 = vadd.f32 0.0, %v399
    %v401 = vpop.f32.mrf.mxu0
    %v402 = vadd.f32 0.0, %v401
    %403 = vdwg.mxu0
    %v405 = vsel %vm156, %v267, 0
    %v408 = vsel %vm229, %v268, 0
    %410 = vmatpush.bf16.msra.mxu0 0
    %411 = vmatpush.bf16.msra.mxu0 0
    %412 = vmatpush.bf16.msra.mxu0 0
    %413 = vmatpush.bf16.msra.mxu0 0
    %414 = vmatpush.bf16.msra.mxu0 0
    %415 = vmatpush.bf16.msra.mxu0 0
    %416 = vmatpush.bf16.msra.mxu0 0
    %417 = vmatpush.bf16.msra.mxu0 %v408
    %418 = vmatmul.bf16.gmra.mxu0 %v405
    %v419 = vpop.f32.mrf.mxu0
    %v420 = vadd.f32 %v400, %v419
    %v421 = vpop.f32.mrf.mxu0
    %v422 = vadd.f32 %v402, %v421
    %423 = vdwg.mxu0
    %424 = vrot.lane.b32.xlu0 %v153, 112
    %v425 = vpop.permute.xlu0 %424
    %426 = vrot.lane.b32.xlu0 %v153, 80
    %v427 = vpop.permute.xlu0 %426
    %v429 = vsel %vm156, %v425, 0
    %v432 = vsel %vm156, %v427, 0
    %434 = vmatpush.bf16.xpose.msra.mxu0 0
    %435 = vmatpush.bf16.xpose.msra.mxu0 0
    %436 = vmatpush.bf16.xpose.msra.mxu0 0
    %437 = vmatpush.bf16.xpose.msra.mxu0 0
    %438 = vmatpush.bf16.xpose.msra.mxu0 0
    %439 = vmatpush.bf16.xpose.msra.mxu0 0
    %440 = vmatpush.bf16.xpose.msra.mxu0 0
    %441 = vmatpush.bf16.xpose.msra.mxu0 %v432
    %442 = vmatmul.bf16.gmra.mxu0 %v429
    %v443 = vpop.f32.mrf.mxu0
    %v444 = vadd.f32 %v150, %v443
    %v445 = vpop.f32.mrf.mxu0
    %446 = vdwg.mxu0
    %447 = vrot.lane.b32.xlu0 %v178, 112
    %v448 = vpop.permute.xlu0 %447
    %449 = vrot.lane.b32.xlu0 %v178, 80
    %v450 = vpop.permute.xlu0 %449
    %v452 = vsel %vm156, %v448, 0
    %v455 = vsel %vm156, %v450, 0
    %457 = vmatpush.bf16.xpose.msra.mxu0 0
    %458 = vmatpush.bf16.xpose.msra.mxu0 0
    %459 = vmatpush.bf16.xpose.msra.mxu0 0
    %460 = vmatpush.bf16.xpose.msra.mxu0 0
    %461 = vmatpush.bf16.xpose.msra.mxu0 0
    %462 = vmatpush.bf16.xpose.msra.mxu0 0
    %463 = vmatpush.bf16.xpose.msra.mxu0 0
    %464 = vmatpush.bf16.xpose.msra.mxu0 %v455
    %465 = vmatmul.bf16.gmra.mxu0 %v452
    %v466 = vpop.f32.mrf.mxu0
    %v467 = vadd.f32 %v150, %v466
    %v468 = vpop.f32.mrf.mxu0
    %469 = vdwg.mxu0
    %v470 = vsel %vm156, %v444, -inf
    %471 = vmax.xlane.f32.xlu0 %v470
    %v472 = vpop.xlane.xlu0 %471
    %v473 = vsel %vm156, %v467, -inf
    %474 = vmax.xlane.f32.xlu0 %v473
    %v475 = vpop.xlane.xlu0 %474
    %v476 = vsub.f32 %v444, %v472
    %v477 = vsub.f32 %v467, %v475
    %v478 = vmul.f32 %v476, 1.442695
    %v479 = vpow.pop %v478
    %v480 = vmul.f32 %v477, 1.442695
    %v481 = vpow.pop %v480
    %v482 = vsel %vm156, %v479, 0.0
    %483 = vadd.xlane.f32.xlu0 %v482
    %v484 = vpop.xlane.xlu0 %483
    %v485 = vsel %vm156, %v481, 0.0
    %486 = vadd.xlane.f32.xlu0 %v485
    %v487 = vpop.xlane.xlu0 %486
    %v488 = vrcp.pop %v484
    %v489 = vrcp.pop %v487
    %v490 = vmul.f32 %v479, %v488
    %v491 = vmul.f32 %v481, %v489
    %v492 = vpack.c.bf16 %v490, %v490
    %v493 = vpack.c.bf16 %v491, %v491
    %494 = vrot.lane.b32.xlu0 %v153, 48
    %v495 = vpop.permute.xlu0 %494
    %v497 = vsel %vm156, %v492, 0
    %v500 = vsel %vm229, %v495, 0
    %502 = vmatpush.bf16.msra.mxu0 0
    %503 = vmatpush.bf16.msra.mxu0 0
    %504 = vmatpush.bf16.msra.mxu0 0
    %505 = vmatpush.bf16.msra.mxu0 0
    %506 = vmatpush.bf16.msra.mxu0 0
    %507 = vmatpush.bf16.msra.mxu0 0
    %508 = vmatpush.bf16.msra.mxu0 0
    %509 = vmatpush.bf16.msra.mxu0 %v500
    %510 = vmatmul.bf16.gmra.mxu0 %v497
    %v511 = vpop.f32.mrf.mxu0
    %v512 = vadd.f32 0.0, %v511
    %v513 = vpop.f32.mrf.mxu0
    %514 = vdwg.mxu0
    %515 = vrot.lane.b32.xlu0 %v178, 48
    %v516 = vpop.permute.xlu0 %515
    %v518 = vsel %vm156, %v493, 0
    %v521 = vsel %vm229, %v516, 0
    %523 = vmatpush.bf16.msra.mxu0 0
    %524 = vmatpush.bf16.msra.mxu0 0
    %525 = vmatpush.bf16.msra.mxu0 0
    %526 = vmatpush.bf16.msra.mxu0 0
    %527 = vmatpush.bf16.msra.mxu0 0
    %528 = vmatpush.bf16.msra.mxu0 0
    %529 = vmatpush.bf16.msra.mxu0 0
    %530 = vmatpush.bf16.msra.mxu0 %v521
    %531 = vmatmul.bf16.gmra.mxu0 %v518
    %v532 = vpop.f32.mrf.mxu0
    %v533 = vadd.f32 0.0, %v532
    %v534 = vpop.f32.mrf.mxu0
    %535 = vdwg.mxu0
    %v536 = vpack.c.bf16 %v533, %v512
    %s537 = scalar_lea.vmem %s4, 8
    %v538 = vld [vmem:[%s537] sm:$0xf]
    %v540 = vsel %vm156, %v536, 0
    %v543 = vsel %vm229, %v538, 0
    %545 = vmatpush.bf16.msra.mxu0 0
    %546 = vmatpush.bf16.msra.mxu0 0
    %547 = vmatpush.bf16.msra.mxu0 0
    %548 = vmatpush.bf16.msra.mxu0 0
    %549 = vmatpush.bf16.msra.mxu0 0
    %550 = vmatpush.bf16.msra.mxu0 0
    %551 = vmatpush.bf16.msra.mxu0 0
    %552 = vmatpush.bf16.msra.mxu0 %v543
    %553 = vmatmul.bf16.gmra.mxu0 %v540
    %v554 = vpop.f32.mrf.mxu0
    %v555 = vadd.f32 0.0, %v554
    %v556 = vpop.f32.mrf.mxu0
    %v557 = vadd.f32 0.0, %v556
    %558 = vdwg.mxu0
    %v559 = vadd.f32 %v420, %v555
    %v560 = vadd.f32 %v422, %v557
    %561 = vrot.lane.b32.xlu0 %v153, 104
    %v562 = vpop.permute.xlu0 %561
    %563 = vrot.lane.b32.xlu0 %v153, 72
    %v564 = vpop.permute.xlu0 %563
    %v566 = vsel %vm156, %v562, 0
    %v569 = vsel %vm156, %v564, 0
    %571 = vmatpush.bf16.xpose.msra.mxu0 0
    %572 = vmatpush.bf16.xpose.msra.mxu0 0
    %573 = vmatpush.bf16.xpose.msra.mxu0 0
    %574 = vmatpush.bf16.xpose.msra.mxu0 0
    %575 = vmatpush.bf16.xpose.msra.mxu0 0
    %576 = vmatpush.bf16.xpose.msra.mxu0 0
    %577 = vmatpush.bf16.xpose.msra.mxu0 0
    %578 = vmatpush.bf16.xpose.msra.mxu0 %v569
    %579 = vmatmul.bf16.gmra.mxu0 %v566
    %v580 = vpop.f32.mrf.mxu0
    %v581 = vadd.f32 %v150, %v580
    %v582 = vpop.f32.mrf.mxu0
    %583 = vdwg.mxu0
    %584 = vrot.lane.b32.xlu0 %v178, 104
    %v585 = vpop.permute.xlu0 %584
    %586 = vrot.lane.b32.xlu0 %v178, 72
    %v587 = vpop.permute.xlu0 %586
    %v589 = vsel %vm156, %v585, 0
    %v592 = vsel %vm156, %v587, 0
    %594 = vmatpush.bf16.xpose.msra.mxu0 0
    %595 = vmatpush.bf16.xpose.msra.mxu0 0
    %596 = vmatpush.bf16.xpose.msra.mxu0 0
    %597 = vmatpush.bf16.xpose.msra.mxu0 0
    %598 = vmatpush.bf16.xpose.msra.mxu0 0
    %599 = vmatpush.bf16.xpose.msra.mxu0 0
    %600 = vmatpush.bf16.xpose.msra.mxu0 0
    %601 = vmatpush.bf16.xpose.msra.mxu0 %v592
    %602 = vmatmul.bf16.gmra.mxu0 %v589
    %v603 = vpop.f32.mrf.mxu0
    %v604 = vadd.f32 %v150, %v603
    %v605 = vpop.f32.mrf.mxu0
    %606 = vdwg.mxu0
    %v607 = vsel %vm156, %v581, -inf
    %608 = vmax.xlane.f32.xlu0 %v607
    %v609 = vpop.xlane.xlu0 %608
    %v610 = vsel %vm156, %v604, -inf
    %611 = vmax.xlane.f32.xlu0 %v610
    %v612 = vpop.xlane.xlu0 %611
    %v613 = vsub.f32 %v581, %v609
    %v614 = vsub.f32 %v604, %v612
    %v615 = vmul.f32 %v613, 1.442695
    %v616 = vpow.pop %v615
    %v617 = vmul.f32 %v614, 1.442695
    %v618 = vpow.pop %v617
    %v619 = vsel %vm156, %v616, 0.0
    %620 = vadd.xlane.f32.xlu0 %v619
    %v621 = vpop.xlane.xlu0 %620
    %v622 = vsel %vm156, %v618, 0.0
    %623 = vadd.xlane.f32.xlu0 %v622
    %v624 = vpop.xlane.xlu0 %623
    %v625 = vrcp.pop %v621
    %v626 = vrcp.pop %v624
    %v627 = vmul.f32 %v616, %v625
    %v628 = vmul.f32 %v618, %v626
    %v629 = vpack.c.bf16 %v627, %v627
    %v630 = vpack.c.bf16 %v628, %v628
    %631 = vrot.lane.b32.xlu0 %v153, 40
    %v632 = vpop.permute.xlu0 %631
    %v634 = vsel %vm156, %v629, 0
    %v637 = vsel %vm229, %v632, 0
    %639 = vmatpush.bf16.msra.mxu0 0
    %640 = vmatpush.bf16.msra.mxu0 0
    %641 = vmatpush.bf16.msra.mxu0 0
    %642 = vmatpush.bf16.msra.mxu0 0
    %643 = vmatpush.bf16.msra.mxu0 0
    %644 = vmatpush.bf16.msra.mxu0 0
    %645 = vmatpush.bf16.msra.mxu0 0
    %646 = vmatpush.bf16.msra.mxu0 %v637
    %647 = vmatmul.bf16.gmra.mxu0 %v634
    %v648 = vpop.f32.mrf.mxu0
    %v649 = vadd.f32 0.0, %v648
    %v650 = vpop.f32.mrf.mxu0
    %651 = vdwg.mxu0
    %652 = vrot.lane.b32.xlu0 %v178, 40
    %v653 = vpop.permute.xlu0 %652
    %v655 = vsel %vm156, %v630, 0
    %v658 = vsel %vm229, %v653, 0
    %660 = vmatpush.bf16.msra.mxu0 0
    %661 = vmatpush.bf16.msra.mxu0 0
    %662 = vmatpush.bf16.msra.mxu0 0
    %663 = vmatpush.bf16.msra.mxu0 0
    %664 = vmatpush.bf16.msra.mxu0 0
    %665 = vmatpush.bf16.msra.mxu0 0
    %666 = vmatpush.bf16.msra.mxu0 0
    %667 = vmatpush.bf16.msra.mxu0 %v658
    %668 = vmatmul.bf16.gmra.mxu0 %v655
    %v669 = vpop.f32.mrf.mxu0
    %v670 = vadd.f32 0.0, %v669
    %v671 = vpop.f32.mrf.mxu0
    %672 = vdwg.mxu0
    %v673 = vpack.c.bf16 %v670, %v649
    %s674 = scalar_lea.vmem %s4, 12
    %v675 = vld [vmem:[%s674] sm:$0xf]
    %v677 = vsel %vm156, %v673, 0
    %v680 = vsel %vm229, %v675, 0
    %682 = vmatpush.bf16.msra.mxu0 0
    %683 = vmatpush.bf16.msra.mxu0 0
    %684 = vmatpush.bf16.msra.mxu0 0
    %685 = vmatpush.bf16.msra.mxu0 0
    %686 = vmatpush.bf16.msra.mxu0 0
    %687 = vmatpush.bf16.msra.mxu0 0
    %688 = vmatpush.bf16.msra.mxu0 0
    %689 = vmatpush.bf16.msra.mxu0 %v680
    %690 = vmatmul.bf16.gmra.mxu0 %v677
    %v691 = vpop.f32.mrf.mxu0
    %v692 = vadd.f32 0.0, %v691
    %v693 = vpop.f32.mrf.mxu0
    %v694 = vadd.f32 0.0, %v693
    %695 = vdwg.mxu0
    %v696 = vadd.f32 %v559, %v692
    %v697 = vadd.f32 %v560, %v694
    %v698 = vld [vmem:[%s5] sm:$0x1]
    %v700 = vperm.slane %v698, 0
    %v702 = vadd.f32 %v696, %v700
    %v703 = vadd.f32 %v697, %v700
    %v704 = vadd.f32 %v43, %v702
    %v705 = vadd.f32 %v44, %v703
    %v706 = vld [vmem:[%s6] sm:$0x1]
    %v707 = vld [vmem:[%s7] sm:$0x1]
    %v708 = vsel %vm47, %v704, 0.0
    %709 = vadd.xlane.f32.xlu0 %v708
    %v710 = vpop.xlane.xlu0 %709
    %v711 = vsel %vm47, %v705, 0.0
    %712 = vadd.xlane.f32.xlu0 %v711
    %v713 = vpop.xlane.xlu0 %712
    %v714 = vmul.f32 %v710, %v60
    %v715 = vmul.f32 %v713, %v60
    %v716 = vsub.f32 %v704, %v714
    %v717 = vsub.f32 %v705, %v715
    %v718 = vmul.f32 %v716, %v716
    %v719 = vmul.f32 %v717, %v717
    %v720 = vsel %vm47, %v718, 0.0
    %721 = vadd.xlane.f32.xlu0 %v720
    %v722 = vpop.xlane.xlu0 %721
    %v723 = vsel %vm47, %v719, 0.0
    %724 = vadd.xlane.f32.xlu0 %v723
    %v725 = vpop.xlane.xlu0 %724
    %v726 = vmul.f32 %v722, %v60
    %v727 = vmul.f32 %v725, %v60
    %v728 = vadd.f32 %v726, 1e-05
    %v729 = vadd.f32 %v727, 1e-05
    %v730 = vrsqrt.pop %v728
    %v731 = vmul.f32 %v730, %v728
    %v732 = vmul.f32 %v731, %v730
    %v733 = vmul.f32 0.5, %v732
    %v734 = vsub.f32 1.5, %v733
    %v735 = vmul.f32 %v730, %v734
    %vm736 = vweird.f32 %v728
    %vm737 = vweird.f32 %v730
    %vm738 = vmor %vm736, %vm737
    %v739 = vsel %vm738, %v730, %v735
    %v740 = vrsqrt.pop %v729
    %v741 = vmul.f32 %v740, %v729
    %v742 = vmul.f32 %v741, %v740
    %v743 = vmul.f32 0.5, %v742
    %v744 = vsub.f32 1.5, %v743
    %v745 = vmul.f32 %v740, %v744
    %vm746 = vweird.f32 %v729
    %vm747 = vweird.f32 %v740
    %vm748 = vmor %vm746, %vm747
    %v749 = vsel %vm748, %v740, %v745
    %v750 = vmul.f32 %v716, %v739
    %v751 = vmul.f32 %v717, %v749
    %v753 = vperm.slane %v706, 0
    %v755 = vmul.f32 %v750, %v753
    %v756 = vmul.f32 %v751, %v753
    %v758 = vperm.slane %v707, 0
    %v760 = vadd.f32 %v755, %v758
    %v761 = vadd.f32 %v756, %v758
    %v762 = vpack.c.bf16 %v761, %v760
    %v763 = vld [vmem:[%s8] sm:$0xf]
    %v764 = vld [vmem:[%s8 + $0x4] sm:$0xf]
    %v765 = vld [vmem:[%s8 + $0x8] sm:$0xf]
    %v766 = vld [vmem:[%s8 + $0xc] sm:$0xf]
    %v767 = vld [vmem:[%s9] sm:$0x1]
    %v769 = vperm.slane %v767, 0
    %v775 = vunpack.c.l.b16 %v763
    %v776 = vunpack.c.l.b16 %v764
    %v777 = vunpack.c.l.b16 %v765
    %v778 = vunpack.c.l.b16 %v766
    %v779 = vpack.c.b16 %v776, %v775
    %v780 = vpack.c.b16 %v778, %v777
    %v784 = vsel %vm47, %v762, 0
    %786 = vmatpush.bf16.msra.mxu0 0
    %787 = vmatpush.bf16.msra.mxu0 0
    %788 = vmatpush.bf16.msra.mxu0 0
    %789 = vmatpush.bf16.msra.mxu0 0
    %790 = vmatpush.bf16.msra.mxu0 0
    %791 = vmatpush.bf16.msra.mxu0 0
    %792 = vmatpush.bf16.msra.mxu0 %v780
    %793 = vmatpush.bf16.msra.mxu0 %v779
    %794 = vmatmul.bf16.gmra.mxu0 %v784
    %v795 = vpop.f32.mrf.mxu0
    %v796 = vadd.f32 %v769, %v795
    %v797 = vpop.f32.mrf.mxu0
    %v798 = vadd.f32 %v769, %v797
    %799 = vdwg.mxu0
    %v800 = vmax.f32 %v796, 0.0
    %v801 = vmax.f32 %v798, 0.0
    %v802 = vpack.c.bf16 %v801, %v800
    %v803 = vld [vmem:[%s10] sm:$0xf]
    %v804 = vld [vmem:[%s10 + $0x4] sm:$0xf]
    %v805 = vld [vmem:[%s10 + $0x8] sm:$0xf]
    %v806 = vld [vmem:[%s10 + $0xc] sm:$0xf]
    %v807 = vld [vmem:[%s10 + $0x10] sm:$0xf]
    %v808 = vld [vmem:[%s10 + $0x14] sm:$0xf]
    %v809 = vld [vmem:[%s10 + $0x18] sm:$0xf]
    %v810 = vld [vmem:[%s10 + $0x1c] sm:$0xf]
    %v811 = vld [vmem:[%s10 + $0x20] sm:$0xf]
    %v812 = vld [vmem:[%s10 + $0x24] sm:$0xf]
    %v813 = vld [vmem:[%s10 + $0x28] sm:$0xf]
    %v814 = vld [vmem:[%s10 + $0x2c] sm:$0xf]
    %v815 = vld [vmem:[%s10 + $0x30] sm:$0xf]
    %v816 = vld [vmem:[%s10 + $0x34] sm:$0xf]
    %v817 = vld [vmem:[%s10 + $0x38] sm:$0xf]
    %v818 = vld [vmem:[%s10 + $0x3c] sm:$0xf]
    %v819 = vld [vmem:[%s11] sm:$0x1]
    %v821 = vperm.slane %v819, 0
    %v839 = vunpack.c.l.b16 %v803
    %v840 = vunpack.c.l.b16 %v804
    %v841 = vunpack.c.l.b16 %v805
    %v842 = vunpack.c.l.b16 %v806
    %v843 = vunpack.c.l.b16 %v807
    %v844 = vunpack.c.l.b16 %v808
    %v845 = vunpack.c.l.b16 %v809
    %v846 = vunpack.c.l.b16 %v810
    %v847 = vunpack.c.l.b16 %v811
    %v848 = vunpack.c.l.b16 %v812
    %v849 = vunpack.c.l.b16 %v813
    %v850 = vunpack.c.l.b16 %v814
    %v851 = vunpack.c.l.b16 %v815
    %v852 = vunpack.c.l.b16 %v816
    %v853 = vunpack.c.l.b16 %v817
    %v854 = vunpack.c.l.b16 %v818
    %v855 = vpack.c.b16 %v840, %v839
    %v856 = vpack.c.b16 %v842, %v841
    %v857 = vpack.c.b16 %v844, %v843
    %v858 = vpack.c.b16 %v846, %v845
    %v859 = vpack.c.b16 %v848, %v847
    %v860 = vpack.c.b16 %v850, %v849
    %v861 = vpack.c.b16 %v852, %v851
    %v862 = vpack.c.b16 %v854, %v853
    %871 = vmatpush.bf16.msra.mxu0 %v862
    %872 = vmatpush.bf16.msra.mxu0 %v861
    %873 = vmatpush.bf16.msra.mxu0 %v860
    %874 = vmatpush.bf16.msra.mxu0 %v859
    %875 = vmatpush.bf16.msra.mxu0 %v858
    %876 = vmatpush.bf16.msra.mxu0 %v857
    %877 = vmatpush.bf16.msra.mxu0 %v856
    %878 = vmatpush.bf16.msra.mxu0 %v855
    %879 = vmatmul.bf16.gmra.mxu0 %v802
    %v880 = vpop.f32.mrf.mxu0
    %v881 = vadd.f32 %v821, %v880
    %v882 = vpop.f32.mrf.mxu0
    %v883 = vadd.f32 %v821, %v882
    %884 = vdwg.mxu0
    %v885 = vadd.f32 %v704, %v881
    %v886 = vadd.f32 %v705, %v883
    %887 = vst.msk [vmem:[#allocation2] sm:$0xff] %vm47, %v885
    %888 = vst.msk [vmem:[#allocation2 + $0x8] sm:$0xff] %vm47, %v886
    // Predicated region
    $region50: #{tpu_custom_call.1} parent=1 // pred_check
      _
    $region51: #{tpu_custom_call.1} parent=1 // pred_check_branch
      %890 = sbr.rel (0) target = $region53
    $region52: #{tpu_custom_call.1} parent=1 // pred_region
      %892 = vsyncadd [#allocation3], 0
      %s893 = sshll.u32 [#allocation2], 4
      %s894 = int_to_ptr.vmem [resolvable:$true] %s893
      %s895 = sshll.u32 %s12, 4
      %s896 = int_to_ptr.hbm [resolvable:$true] %s895
      %901 = dma.vmem_to_hbm [thread:$0]  %s894, 256, %s896, [#allocation3], 128, 128, 8
    $region53: #{tpu_custom_call.1} parent=1 // pred_fallthru
      _
    // Predicated region
    $region54: #{tpu_custom_call.1} parent=1 // pred_check
      _
    $region55: #{tpu_custom_call.1} parent=1 // pred_check_branch
      %903 = sbr.rel (0) target = $region57
    $region56: #{tpu_custom_call.1} parent=1 // pred_region
      %905 = dma.done [#allocation3], 256
    $region57: #{tpu_custom_call.1} parent=1 // pred_fallthru
      _
    %906 = vsyncpa [#allocation3], 1

</llo_original>
